<compile_context>
chip_gen: v5e
topology: v5e:2x2
jax: 0.10.0
libtpu: 0.0.40
codegen_flags: <defaults>
</compile_context>

<pallas_src>
import jax
import jax.numpy as jnp
from jax.experimental import pallas as pl
from jax.experimental.pallas import tpu as pltpu

EPS = 1e-10
_LANE = 128
_MIN_GRID_STEPS = 4  # feed both v7x TensorCores + give the pipeline work to overlap


def _l2norm_kernel(x_ref, w_ref, o_ref):
    # x_ref: (C, T) tile — channels on sublanes, spatial positions on lanes.
    # w_ref: (C, 1) per-channel scale.
    x = x_ref[...]
    xf = x.astype(jnp.float32)
    # Sum of squares over channels (sublane axis); always accumulate in f32.
    # (If a bundle dump ever showed the VALU slot binding in the bf16 case, this
    # add-tree could move to the MXU via jnp.dot(ones((1,C)), xf*xf); at f32 the
    # kernel is HBM-bound, so the VALU reduce is kept.)
    sq_sum = jnp.sum(xf * xf, axis=0, keepdims=True)            # (1, T)
    norm = jnp.sqrt(sq_sum) + EPS                               # eps added to the norm
    inv = pl.reciprocal(norm, approx=False)                     # EUP slot, exact

    if o_ref.dtype == jnp.bfloat16:
        # bf16 I/O (v6e/v7x native bf16 VPU): downcast inv and weight once and do
        # the (C,T) scaling multiplies in bf16 instead of upcasting the whole tile.
        o_ref[...] = x * inv.astype(jnp.bfloat16) * w_ref[...].astype(jnp.bfloat16)
    else:
        o_ref[...] = (xf * inv * w_ref[...].astype(jnp.float32)).astype(o_ref.dtype)


def _per_buffer_budget_bytes():
    """Generation-aware per-buffer VMEM budget.

    v7x has half the VMEM of v5e/v6e (64 MiB/TC) but ~2.2x the HBM bandwidth, so
    the fixed ~0.35us per-step overhead is a bigger fraction of each step: use
    6 MiB/buffer there (4 buffers ~ 24 MiB, under the 32 MiB scoped limit).
    Elsewhere 4 MiB/buffer amortizes the step overhead to a few percent while
    2x(in+out) buffers + weight stay under the explicit 32 MiB vmem limit.
    """
    try:
        info = pltpu.get_tpu_info()
        vmem = getattr(info, "vmem_capacity_bytes", None)
        if vmem is not None and vmem <= 64 * 1024 * 1024:       # v7x-class per-TC VMEM
            return 6 * 1024 * 1024
    except Exception:
        pass
    return 4 * 1024 * 1024


def _pick_tile_hw(N, C, HW, itemsize, target_bytes):
    """Largest legal lane-tile under the budget, with >= _MIN_GRID_STEPS grid steps."""
    if C * HW * itemsize <= target_bytes:
        # Full spatial row per image: block == full dim is always legal (even when
        # HW is not a multiple of 128) and avoids partial-block masking.
        tile_hw = HW
    else:
        # Largest multiple of 128 lanes under the budget; ragged last block is
        # handled by Pallas masking (grid uses pl.cdiv).
        t = (target_bytes // (C * itemsize)) // _LANE * _LANE
        tile_hw = max(_LANE, int(t))
    # Guarantee enough grid steps to shard across v7x's two TensorCores and to give
    # the double-buffered pipeline something to overlap.
    steps = N * pl.cdiv(HW, tile_hw)
    if steps < _MIN_GRID_STEPS and HW > _LANE:
        want_tiles = pl.cdiv(_MIN_GRID_STEPS, N)
        t = pl.cdiv(HW, want_tiles)
        t = max(_LANE, pl.cdiv(t, _LANE) * _LANE)               # multiple of 128 lanes
        tile_hw = min(tile_hw, t)
    return tile_hw


def l2norm_nchw(x, weight, *, tile_hw=None):
    """x: (N, C, H, W); weight: (C,). Returns (N, C, H, W)."""
    N, C, H, W = x.shape
    HW = H * W

    # Tiny feature maps (lane width < 128) would force masked vst.msk partial stores
    # and per-step DMAs too small to hide the fixed step overhead; leave them to XLA.
    if HW < _LANE:
        norm = jnp.sqrt(jnp.sum(x * x, axis=1, keepdims=True)) + EPS
        return (weight.reshape(1, C, 1, 1) * (x / norm)).astype(x.dtype)

    x3 = x.reshape(N, C, HW)                                    # free: contiguous
    if tile_hw is None:
        tile_hw = _pick_tile_hw(N, C, HW, x.dtype.itemsize, _per_buffer_budget_bytes())
    grid = (N, pl.cdiv(HW, tile_hw))
    w2 = weight.reshape(C, 1)

    out = pl.pallas_call(
        _l2norm_kernel,
        out_shape=jax.ShapeDtypeStruct((N, C, HW), x.dtype),
        grid_spec=pltpu.PrefetchScalarGridSpec(
            num_scalar_prefetch=0,
            grid=grid,
            in_specs=[
                # N squeezed; kernel sees a (C, tile_hw) slab.
                pl.BlockSpec((None, C, tile_hw), lambda n, t: (n, 0, t)),
                pl.BlockSpec((C, 1), lambda n, t: (0, 0)),
            ],
            out_specs=pl.BlockSpec((None, C, tile_hw), lambda n, t: (n, 0, t)),
        ),
        compiler_params=pltpu.CompilerParams(
            # Both axes independent -> shard across TensorCores on v7x.
            dimension_semantics=("parallel", "parallel"),
            # Explicit scoped-VMEM limit: 4 buffers x up-to-6 MiB + weight fits; also
            # lifts v5e's 16 MiB default so the 4 MiB-buffer config compiles there.
            vmem_limit_bytes=32 * 1024 * 1024,
        ),
    )(x3, w2)
    return out.reshape(N, C, H, W)


@jax.jit
def l2norm_forward(x_nchw, weight):
    return l2norm_nchw(x_nchw, weight)


def l2norm_reference(x_nchw, weight):
    xf = x_nchw.astype(jnp.float32)
    norm = jnp.sqrt(jnp.sum(xf * xf, axis=1, keepdims=True)) + EPS
    out = weight.reshape(1, -1, 1, 1).astype(jnp.float32) * (xf / norm)
    return out.astype(x_nchw.dtype)


if __name__ == "__main__":
    # Small shape consistent with the module's forward (NCHW conv feature map).
    N, C, H, W = 2, 4, 16, 16
    scale = 20.0

    key = jax.random.PRNGKey(0)
    x = jax.random.normal(key, (N, C, H, W), dtype=jnp.float32)
    # Deterministic parameter init: nn.init.constant_(weight, scale)
    weight = jnp.full((C,), scale, dtype=jnp.float32)

    out = jax.block_until_ready(l2norm_forward(x, weight))
    ref = l2norm_reference(x, weight)
    assert out.shape == x.shape and out.dtype == x.dtype
    assert jnp.allclose(out, ref, atol=1e-5, rtol=1e-5)

    # SSD-like odd spatial size (H*W = 361, not a multiple of 128): exercises the
    # multiple-of-128 sub-tiling + masked last block path with no wrapper transposes.
    x2 = jax.random.normal(jax.random.PRNGKey(1), (1, 8, 19, 19), dtype=jnp.float32)
    w2 = jnp.full((8,), scale, dtype=jnp.float32)
    out2 = jax.block_until_ready(l2norm_forward(x2, w2))
    ref2 = l2norm_reference(x2, w2)
    assert jnp.allclose(out2, ref2, atol=1e-5, rtol=1e-5)

    # bf16 path: f32 accumulation, bf16 scaling multiplies.
    x3 = jax.random.normal(jax.random.PRNGKey(2), (2, 8, 16, 16), dtype=jnp.bfloat16)
    w3 = jnp.full((8,), scale, dtype=jnp.float32)
    out3 = jax.block_until_ready(l2norm_forward(x3, w3))
    ref3 = l2norm_reference(x3, w3)
    assert out3.dtype == jnp.bfloat16
    assert jnp.allclose(out3.astype(jnp.float32), ref3.astype(jnp.float32),
                        atol=2e-2, rtol=2e-2)

    print("KERNEL_OK")
</pallas_src>

<mosaic_0001>
module attributes {stable_mosaic.version = 11 : i64} {
  func.func @_l2norm_kernel(%arg0: i32, %arg1: i32, %arg2: memref<1x4x128xf32, #tpu.memory_space<vmem>>, %arg3: memref<4x1xf32, #tpu.memory_space<vmem>>, %arg4: memref<1x4x128xf32, #tpu.memory_space<vmem>>) attributes {dimension_semantics = [#tpu.dimension_semantics<parallel>, #tpu.dimension_semantics<parallel>], iteration_bounds = array<i64: 2, 2>, scalar_prefetch = 0 : i64, scratch_operands = 0 : i64, tpu.core_type = #tpu.core_type<tc>, window_params = [{transform_indices = @transform_0, window_bounds = array<i64: 1, 4, 128>}, {pipeline_mode = #tpu.pipeline_mode<synchronous>, transform_indices = @transform_1, window_bounds = array<i64: 4, 1>}, {transform_indices = @transform_2, window_bounds = array<i64: 1, 4, 128>}]} {
    %c0 = arith.constant 0 : index
    %c0_0 = arith.constant 0 : index
    %c0_1 = arith.constant 0 : index
    %0 = vector.load %arg2[%c0, %c0_0, %c0_1] : memref<1x4x128xf32, #tpu.memory_space<vmem>>, vector<1x4x128xf32>
    %1 = vector.shape_cast %0 : vector<1x4x128xf32> to vector<4x128xf32>
    %2 = arith.mulf %1, %1 : vector<4x128xf32>
    %cst = arith.constant dense<0.000000e+00> : vector<128xf32>
    %3 = vector.multi_reduction <add>, %2, %cst [0] : vector<4x128xf32> to vector<128xf32>
    %4 = vector.shape_cast %3 : vector<128xf32> to vector<1x128xf32>
    %5 = math.sqrt %4 : vector<1x128xf32>
    %cst_2 = arith.constant 1.000000e-10 : f32
    %6 = vector.broadcast %cst_2 : f32 to vector<1x128xf32>
    %7 = arith.addf %5, %6 : vector<1x128xf32>
    %8 = tpu.reciprocal %7 : vector<1x128xf32> -> vector<1x128xf32>
    %9 = vector.broadcast %8 : vector<1x128xf32> to vector<4x128xf32>
    %10 = arith.mulf %1, %9 : vector<4x128xf32>
    %c0_3 = arith.constant 0 : index
    %c0_4 = arith.constant 0 : index
    %11 = vector.load %arg3[%c0_3, %c0_4] : memref<4x1xf32, #tpu.memory_space<vmem>>, vector<4x1xf32>
    %12 = vector.broadcast %11 : vector<4x1xf32> to vector<4x128xf32>
    %13 = arith.mulf %10, %12 : vector<4x128xf32>
    %c0_5 = arith.constant 0 : index
    %c0_6 = arith.constant 0 : index
    %c0_7 = arith.constant 0 : index
    %14 = vector.load %arg4[%c0_5, %c0_6, %c0_7] : memref<1x4x128xf32, #tpu.memory_space<vmem>>, vector<1x4x128xf32>
    %15 = vector.shape_cast %14 : vector<1x4x128xf32> to vector<4x128xf32>
    %16 = vector.shape_cast %13 : vector<4x128xf32> to vector<1x4x128xf32>
    tpu.vector_store %arg4[%c0_5, %c0_6, %c0_7], %16 {strides = array<i32>} : memref<1x4x128xf32, #tpu.memory_space<vmem>>, vector<1x4x128xf32>,
    return
  }
  func.func @transform_0(%arg0: i32, %arg1: i32) -> (i32, i32, i32) {
    %c0_i32 = arith.constant 0 : i32
    %c0_i32_0 = arith.constant 0 : i32
    return %arg0, %c0_i32, %arg1 : i32, i32, i32
  }
  func.func @transform_1(%arg0: i32, %arg1: i32) -> (i32, i32) {
    %c0_i32 = arith.constant 0 : i32
    %c0_i32_0 = arith.constant 0 : i32
    %c0_i32_1 = arith.constant 0 : i32
    return %c0_i32, %c0_i32_0 : i32, i32
  }
  func.func @transform_2(%arg0: i32, %arg1: i32) -> (i32, i32, i32) {
    %c0_i32 = arith.constant 0 : i32
    %c0_i32_0 = arith.constant 0 : i32
    return %arg0, %c0_i32, %arg1 : i32, i32, i32
  }
}

</mosaic_0001>

<llo_original>
// kernel: l2norm_forward.1
$region0: #{l2norm_forward.1}
  #allocation0 [shape = 'u32[]', space=smem, size = 0x4, offset = 0x4, fixed_abs, tag = 'smem constant byte address 0x4 - core index']
  #allocation1 [shape = 'u32[72,128]{1,0:T(1,128)}', space=vmem, size = 0x9000, scoped, tag = 'internal scratch']
  %s0 = inlined_call_operand.vmem [shape: f32[2,4,256], index: 0, kind: input, shape index: {}]
  %s1 = inlined_call_operand.vmem [shape: f32[4,1], index: 1, kind: input, shape index: {}]
  %s2 = inlined_call_operand.vmem [shape: f32[2,4,256], index: 2, kind: output, shape index: {}]
  %s3 = sld [smem:[#allocation0]]
  $region41: #{l2norm_forward.1} parent=0
    _
  %s5 = ssub.s32 1, %s3
  %s6 = scalar_select 0, %s5, %s3
  loop: start=0, step=1, limit=6
  $region2: #{l2norm_forward.1} parent=0 // loop_pre_header
    _
  $region3: #{l2norm_forward.1} parent=0 // loop_header
    %s8 = sphi 0, %s12
    %p9 = scmp.ge.s32.totalorder %s8, 6
    %s15 = sphi 0, %s27
    %s16 = sphi 0, %s23
    %s17 = sphi 0, %s15
    %s18 = sphi 0, %s16
    %s19 = sphi 0, %s17
    %s20 = sphi 0, %s18
    %s32 = sphi 0, %s34
    %s35 = sphi 0, %s32
    %s36 = sphi 0, %s35
    %s52 = sphi 0, %s36
    %s56 = sphi 0, %s56
    %s58 = sphi 0, %s56
    %s59 = sphi 0, %s58
    %s73 = sphi 0, %s59
    %s81 = sphi 0, %s83
    %s84 = sphi 0, %s81
    %s85 = sphi 0, %s84
    %s101 = sphi 0, %s85
  $region4: #{l2norm_forward.1} parent=0 // loop_header_branch
    %11 = sbr.rel (%p9) target = $region8
  $region5: #{l2norm_forward.1} parent=0 // loop_body
    %s13 = ssub.s32 %s8, 1
    %s14 = ssub.s32 %s8, 2
    %s21 = sadd.s32 1, %s16
    %p22 = scmp.ge.s32.totalorder %s21, 2
    %s23 = scalar_select %p22, 0, %s21
    %s24 = sadd.s32 1, %s15
    %s25 = scalar_select %p22, %s24, %s15
    %p26 = scmp.ge.s32.totalorder %s25, 2
    %s27 = scalar_select %p26, 0, %s25
    %s28 = ssub.s32 %s15, %s27
    %s29 = ssub.s32 %s16, %s23
    %s30 = sor.u32 %s28, %s29
    %p31 = scmp.eq.s32.totalorder %s30, 0
    %s33 = sadd.s32 %s32, 1
    %s34 = scalar_select %p31, %s32, %s33
    %p37 = pneg %p31
    %p38 = scmp.eq.s32.totalorder %s8, 3
    %p39 = por %p37, %p38
    %p40 = scmp.ne.s32.totalorder %s32, %s35
    %p41 = scmp.eq.s32.totalorder %s8, 0
    %p42 = por %p40, %p41
    %p43 = scmp.ne.s32.totalorder %s32, %s35
    %p44 = scmp.eq.s32.totalorder %s13, 3
    %p45 = por %p43, %p44
    %p46 = scmp.ne.s32.totalorder %s35, %s36
    %p47 = scmp.eq.s32.totalorder %s13, 0
    %p48 = por %p46, %p47
    %p49 = scmp.ne.s32.totalorder %s35, %s36
    %p50 = scmp.eq.s32.totalorder %s14, 3
    %p51 = por %p49, %p50
    %p53 = scmp.ne.s32.totalorder %s36, %s52
    %p54 = scmp.eq.s32.totalorder %s14, 0
    %p55 = por %p53, %p54
    %s57 = sadd.s32 %s56, 1
    %p60 = scmp.eq.s32.totalorder %s8, 3
    %p61 = scmp.ne.s32.totalorder %s56, %s58
    %p62 = scmp.eq.s32.totalorder %s8, 0
    %p63 = por %p61, %p62
    %p64 = scmp.ne.s32.totalorder %s56, %s58
    %p65 = scmp.eq.s32.totalorder %s13, 3
    %p66 = por %p64, %p65
    %p67 = scmp.ne.s32.totalorder %s58, %s59
    %p68 = scmp.eq.s32.totalorder %s13, 0
    %p69 = por %p67, %p68
    %p70 = scmp.ne.s32.totalorder %s58, %s59
    %p71 = scmp.eq.s32.totalorder %s14, 3
    %p72 = por %p70, %p71
    %p74 = scmp.ne.s32.totalorder %s59, %s73
    %p75 = scmp.eq.s32.totalorder %s14, 0
    %p76 = por %p74, %p75
    %s77 = ssub.s32 %s15, %s27
    %s78 = ssub.s32 %s16, %s23
    %s79 = sor.u32 %s77, %s78
    %p80 = scmp.eq.s32.totalorder %s79, 0
    %s82 = sadd.s32 %s81, 1
    %s83 = scalar_select %p80, %s81, %s82
    %p86 = pneg %p80
    %p87 = scmp.eq.s32.totalorder %s8, 3
    %p88 = por %p86, %p87
    %p89 = scmp.ne.s32.totalorder %s81, %s84
    %p90 = scmp.eq.s32.totalorder %s8, 0
    %p91 = por %p89, %p90
    %p92 = scmp.ne.s32.totalorder %s81, %s84
    %p93 = scmp.eq.s32.totalorder %s13, 3
    %p94 = por %p92, %p93
    %p95 = scmp.ne.s32.totalorder %s84, %s85
    %p96 = scmp.eq.s32.totalorder %s13, 0
    %p97 = por %p95, %p96
    %p98 = scmp.ne.s32.totalorder %s84, %s85
    %p99 = scmp.eq.s32.totalorder %s14, 3
    %p100 = por %p98, %p99
    %p102 = scmp.ne.s32.totalorder %s85, %s101
    %p103 = scmp.eq.s32.totalorder %s14, 0
    %p104 = por %p102, %p103
    %p105 = scmp.le.s32.totalorder 1, %s8
    %p106 = scmp.lt.s32.totalorder %s8, 5
    %p107 = pnand %p105, %p106
    %p108 = pneg %p107
    // Predicated region
    $region9: #{l2norm_forward.1} parent=5 // pred_check
      _
    $region10: #{l2norm_forward.1} parent=5 // pred_check_branch
      %110 = sbr.rel (%p107) target = $region12
    $region11: #{l2norm_forward.1} parent=5 // pred_region
      %s111 = ssub.s32 %s8, 1
      // Predicated region
      $region13: #{l2norm_forward.1} parent=11 // pred_check
        %p112 = pneg %p69
      $region14: #{l2norm_forward.1} parent=11 // pred_check_branch
        %114 = sbr.rel (%p112) target = $region16
      $region15: #{l2norm_forward.1} parent=11 // pred_region
        _
      $region16: #{l2norm_forward.1} parent=11 // pred_fallthru
        _
    $region12: #{l2norm_forward.1} parent=5 // pred_fallthru
      _
    %p115 = scmp.lt.s32.totalorder %s8, 4
    // Predicated region
    $region17: #{l2norm_forward.1} parent=5 // pred_check
      %p116 = pneg %p115
    $region18: #{l2norm_forward.1} parent=5 // pred_check_branch
      %118 = sbr.rel (%p116) target = $region20
    $region19: #{l2norm_forward.1} parent=5 // pred_region
      // Predicated region
      $region21: #{l2norm_forward.1} parent=19 // pred_check
        %p119 = pneg %p42
      $region22: #{l2norm_forward.1} parent=19 // pred_check_branch
        %121 = sbr.rel (%p119) target = $region24
      $region23: #{l2norm_forward.1} parent=19 // pred_region
        %p122 = scmp.lt.s32.totalorder %s15, 1
        %s123 = scalar_select %p122, %s15, 1
        %p124 = scmp.lt.s32.totalorder %s16, 1
        %s125 = scalar_select %p124, %s16, 1
        %s126 = smul.addr %s123, 2
        %s127 = sadd.s32 %s125, %s126
        %s128 = smul.addr %s127, 4
        %s129 = scalar_lea.vmem %s0, %s128
      $region24: #{l2norm_forward.1} parent=19 // pred_fallthru
        _
    $region20: #{l2norm_forward.1} parent=5 // pred_fallthru
      _
    %p130 = scmp.le.s32.totalorder 1, %s8
    %p131 = scmp.lt.s32.totalorder %s8, 5
    %p132 = pnand %p130, %p131
    %p133 = pneg %p132
    // Predicated region
    $region25: #{l2norm_forward.1} parent=5 // pred_check
      _
    $region26: #{l2norm_forward.1} parent=5 // pred_check_branch
      %135 = sbr.rel (%p132) target = $region28
    $region27: #{l2norm_forward.1} parent=5 // pred_region
      %s136 = ssub.s32 %s8, 1
      %p137 = scmp.lt.s32.totalorder %s17, 1
      %s138 = scalar_select %p137, %s17, 1
      %p139 = scmp.lt.s32.totalorder %s18, 1
      %s140 = scalar_select %p139, %s18, 1
      %s141 = smul.addr %s138, 2
      %s142 = sadd.s32 %s140, %s141
      %s143 = smul.addr %s142, 4
      %s144 = scalar_lea.vmem %s0, %s143
      %p145 = pneg %p48
      %p146 = pneg %p45
      %p147 = pneg %p69
      %p148 = pneg %p66
      %p149 = pneg %p97
      %p150 = pneg %p94
      %p151 = scmp.lt.s32.totalorder %s17, 1
      %s152 = scalar_select %p151, %s17, 1
      %p153 = scmp.lt.s32.totalorder %s18, 1
      %s154 = scalar_select %p153, %s18, 1
      %s155 = smul.addr %s152, 2
      %s156 = sadd.s32 %s154, %s155
      %s157 = smul.addr %s156, 4
      %s158 = scalar_lea.vmem %s2, %s157
      %p159 = scmp.lt.s32.totalorder %s17, 1
      %s160 = scalar_select %p159, %s17, 1
      %p161 = scmp.lt.s32.totalorder %s18, 1
      %s162 = scalar_select %p161, %s18, 1
      %s163 = smul.addr %s160, 2
      %s164 = sadd.s32 %s162, %s163
      %s165 = smul.addr %s164, 4
      %s166 = scalar_lea.vmem %s0, %s165
      %p167 = scmp.lt.s32.totalorder %s17, 1
      %s168 = scalar_select %p167, %s17, 1
      %p169 = scmp.lt.s32.totalorder %s18, 1
      %s170 = scalar_select %p169, %s18, 1
      %s171 = smul.addr %s168, 2
      %s172 = sadd.s32 %s170, %s171
      %s173 = smul.addr %s172, 4
      %s174 = scalar_lea.vmem %s2, %s173
      %v175 = vld [vmem:[%s166] sm:$0xf]
      %v176 = vmul.f32 %v175, %v175
      %vm177 = vcmask 1043456
      %v178 = vsel %vm177, %v176, 0.0
      %v179 = vrot.slane %v178, 4
      %v180 = vadd.f32 %v178, %v179
      %v181 = vrot.slane %v180, 2
      %v182 = vadd.f32 %v180, %v181
      %v183 = vrot.slane %v182, 1
      %v184 = vadd.f32 %v182, %v183
      %v185 = vrsqrt.pop %v184
      %v186 = vmul.f32 %v185, %v184
      %v187 = vmul.f32 %v186, %v185
      %v188 = vmul.f32 0.5, %v187
      %v189 = vsub.f32 1.5, %v188
      %v190 = vmul.f32 %v185, %v189
      %v191 = vmul.f32 %v184, %v190
      %vm192 = vcmp.eq.f32.partialorder %v184, inf
      %v193 = vsel %vm192, %v184, %v191
      %vm194 = vcmp.eq.f32.partialorder %v184, 0.0
      %v195 = vand.u32 %v184, 2147483648
      %v196 = vsel %vm194, %v195, %v193
      %v197 = vadd.f32 %v196, 1e-10
      %v198 = vrcp.pop %v197
      %v199 = vmul.f32 %v197, %v198
      %v200 = vsub.f32 1.0, %v199
      %v201 = vmul.f32 %v198, %v200
      %v202 = vadd.f32 %v198, %v201
      %vm203 = vweird.f32 %v197
      %vm204 = vweird.f32 %v198
      %vm205 = vmor %vm203, %vm204
      %v206 = vsel %vm205, %v198, %v202
      %v207 = vand.u32 2147483647, %v197
      %vm208 = vcmp.eq.f32.partialorder %v207, 8.507059e+37
      %v209 = vand.u32 %v197, 2147483648
      %v210 = vor.u32 1.1754944e-38, %v209
      %v211 = vsel %vm208, %v210, %v206
      %v212 = vmul.f32 %v175, %v211
      %v213 = vld [vmem:[%s1] sm:$0xf]
      %215 = vset.pattern.permute.xlu0 0
      %216 = vperm.xlu0 %215, %v213
      %v217 = vpop.permute.xlu0 %216
      %v219 = vmul.f32 %v212, %v217
      %220 = vst [vmem:[%s174] sm:$0xf] %v219
      %p221 = scmp.lt.s32.totalorder %s17, 1
      %s222 = scalar_select %p221, %s17, 1
      %p223 = scmp.lt.s32.totalorder %s18, 1
      %s224 = scalar_select %p223, %s18, 1
      %s225 = smul.addr %s222, 2
      %s226 = sadd.s32 %s224, %s225
      %s227 = smul.addr %s226, 4
      %s228 = scalar_lea.vmem %s2, %s227
      // Predicated region
      $region29: #{l2norm_forward.1} parent=27 // pred_check
        %p229 = pneg %p94
      $region30: #{l2norm_forward.1} parent=27 // pred_check_branch
        %231 = sbr.rel (%p229) target = $region32
      $region31: #{l2norm_forward.1} parent=27 // pred_region
        _
      $region32: #{l2norm_forward.1} parent=27 // pred_fallthru
        _
    $region28: #{l2norm_forward.1} parent=5 // pred_fallthru
      _
    %p232 = scmp.le.s32.totalorder 2, %s8
    // Predicated region
    $region33: #{l2norm_forward.1} parent=5 // pred_check
      %p233 = pneg %p232
    $region34: #{l2norm_forward.1} parent=5 // pred_check_branch
      %235 = sbr.rel (%p233) target = $region36
    $region35: #{l2norm_forward.1} parent=5 // pred_region
      %s236 = ssub.s32 %s8, 2
      // Predicated region
      $region37: #{l2norm_forward.1} parent=35 // pred_check
        %p237 = pneg %p100
      $region38: #{l2norm_forward.1} parent=35 // pred_check_branch
        %239 = sbr.rel (%p237) target = $region40
      $region39: #{l2norm_forward.1} parent=35 // pred_region
        %p240 = scmp.lt.s32.totalorder %s19, 1
        %s241 = scalar_select %p240, %s19, 1
        %p242 = scmp.lt.s32.totalorder %s20, 1
        %s243 = scalar_select %p242, %s20, 1
        %s244 = smul.addr %s241, 2
        %s245 = sadd.s32 %s243, %s244
        %s246 = smul.addr %s245, 4
        %s247 = scalar_lea.vmem %s2, %s246
      $region40: #{l2norm_forward.1} parent=35 // pred_fallthru
        _
    $region36: #{l2norm_forward.1} parent=5 // pred_fallthru
      _
  $region6: #{l2norm_forward.1} parent=0 // loop_footer
    %s12 = sadd.s32 1, %s8
  $region7: #{l2norm_forward.1} parent=0 // loop_footer_branch
    %7 = sbr.rel target = $region3
  $region8: #{l2norm_forward.1} parent=0 // loop_exit
    _

</llo_original>
